<compile_context>
chip_gen: v6e
topology: v6e:2x2x1
jax: 0.10.0
libtpu: 0.0.40
codegen_flags: <defaults>
</compile_context>

<pallas_src>
from functools import partial

import jax
import jax.numpy as jnp
from jax.experimental import pallas as pl
from jax.experimental.pallas import tpu as pltpu

H = 16          # low-res mask height (SAM uses 256; small here)
W = 16          # low-res mask width
CONV_CH = 32    # classification head conv channels
NUM_CLASSES = 4
B = 2
LANE = 128      # padded lane width for the linear weight / output


def _head_kernel(patches_ref, wconv_ref, bconv_ref, wlin_ref, blin_ref, out_ref,
                 *, batch, hw):
    # patches_ref: (9, batch*hw)   im2col slab, lane-dense
    # wconv_ref  : (32, 9)         conv weight, tap on lanes
    # bconv_ref  : (32, 1)         conv bias
    # wlin_ref   : (32, LANE)      linear weight (transposed, zero-padded lanes)
    # blin_ref   : (1, LANE)       linear bias (zero-padded lanes)
    # out_ref    : (batch, LANE)   padded class logits

    # 3x3 conv over all batch elements at once: one MXU matmul.
    conv = jnp.dot(wconv_ref[...], patches_ref[...],
                   preferred_element_type=jnp.float32)          # [32, batch*hw]
    conv = jnp.maximum(conv + bconv_ref[...], 0.0)               # bias + ReLU

    inv_hw = 1.0 / hw
    rows = []
    for b in range(batch):
        # AdaptiveAvgPool2d((1,1)): mean over this batch element's spatial lanes.
        # hw == 256, so slice starts are tile-aligned lane offsets.
        pooled_b = jnp.sum(conv[:, b * hw:(b + 1) * hw], axis=1,
                           keepdims=True) * inv_hw               # [32, 1]
        # Linear(32, num_classes) (lane-padded): sum over channels (sublanes).
        rows.append(jnp.sum(pooled_b * wlin_ref[...], axis=0,
                            keepdims=True))                      # [1, LANE]

    out_ref[...] = jnp.concatenate(rows, axis=0) + blin_ref[...]  # single store


def sam_fine_tuner_head(low_res_masks, wconv, bconv, wlin, blin):
    """low_res_masks: [B, 1, H, W] float32.
    Returns (low_res_masks, class_logits [B, num_classes])."""
    b, _, h, w = low_res_masks.shape
    hw = h * w

    # --- im2col in the wrapper (pad is a fused XLA intermediate, not a kernel input) ---
    x = low_res_masks[:, 0].astype(jnp.float32)                  # [B, H, W]
    xpad = jnp.pad(x, ((0, 0), (1, 1), (1, 1)))                  # [B, H+2, W+2]
    taps = [xpad[:, dy:dy + h, dx:dx + w].reshape(b * hw)
            for dy in range(3) for dx in range(3)]
    patches = jnp.stack(taps, axis=0)                            # [9, B*H*W] lane-dense

    # --- parameter layouts ---
    wconv_flat = wconv.reshape(CONV_CH, 9).astype(jnp.float32)   # [32, 9]
    bconv2 = bconv.reshape(CONV_CH, 1).astype(jnp.float32)       # [32, 1]
    wlin_pad = jnp.pad(wlin.T.astype(jnp.float32),
                       ((0, 0), (0, LANE - NUM_CLASSES)))        # [32, 128]
    blin_pad = jnp.pad(blin.reshape(1, NUM_CLASSES).astype(jnp.float32),
                       ((0, 0), (0, LANE - NUM_CLASSES)))        # [1, 128]

    kernel = partial(_head_kernel, batch=b, hw=hw)

    logits_pad = pl.pallas_call(
        kernel,
        out_shape=jax.ShapeDtypeStruct((b, LANE), jnp.float32),
        grid_spec=pl.GridSpec(
            grid=(1,),
            in_specs=[
                pl.BlockSpec((9, b * hw), lambda i: (0, 0)),
                pl.BlockSpec((CONV_CH, 9), lambda i: (0, 0)),
                pl.BlockSpec((CONV_CH, 1), lambda i: (0, 0)),
                pl.BlockSpec((CONV_CH, LANE), lambda i: (0, 0)),
                pl.BlockSpec((1, LANE), lambda i: (0, 0)),
            ],
            out_specs=pl.BlockSpec((b, LANE), lambda i: (0, 0)),
        ),
        compiler_params=pltpu.CompilerParams(
            dimension_semantics=("arbitrary",)),
    )(patches, wconv_flat, bconv2, wlin_pad, blin_pad)

    class_logits = logits_pad[:, :NUM_CLASSES]                   # [B, NUM_CLASSES]
    return low_res_masks, class_logits


def _reference_head(low_res_masks, wconv, bconv, wlin, blin):
    """Pure-JAX reference of Conv2d(1,32,3,pad=1)->ReLU->AvgPool(1,1)->Flatten->Linear."""
    x = low_res_masks[:, 0]                                      # [B, H, W]
    xpad = jnp.pad(x, ((0, 0), (1, 1), (1, 1)))
    conv = jnp.zeros((x.shape[0], CONV_CH, H, W), jnp.float32)
    for dy in range(3):
        for dx in range(3):
            conv = conv + wconv[None, :, dy, dx, None, None] * xpad[:, None, dy:dy + H, dx:dx + W]
    conv = jax.nn.relu(conv + bconv[None, :, None, None])
    pooled = conv.mean(axis=(2, 3))                              # [B, 32]
    return pooled @ wlin.T + blin[None, :]


if __name__ == "__main__":
    key = jax.random.PRNGKey(0)
    k_mask, k_wc, k_bc, k_wl, k_bl = jax.random.split(key, 5)

    # Synthetic low-res SAM mask logits (stand-in for sam(batched_input) output).
    low_res_masks = jax.random.normal(k_mask, (B, 1, H, W), dtype=jnp.float32)

    # Deterministic classification-head parameters (shapes from nn.Sequential in __init__).
    wconv = 0.1 * jax.random.normal(k_wc, (CONV_CH, 3, 3), dtype=jnp.float32)       # Conv2d(1,32,3) weight (C=1 squeezed)
    bconv = 0.1 * jax.random.normal(k_bc, (CONV_CH,), dtype=jnp.float32)
    wlin = 0.1 * jax.random.normal(k_wl, (NUM_CLASSES, CONV_CH), dtype=jnp.float32)  # Linear(32, num_classes) [out, in]
    blin = 0.1 * jax.random.normal(k_bl, (NUM_CLASSES,), dtype=jnp.float32)

    masks_out, class_logits = sam_fine_tuner_head(low_res_masks, wconv, bconv, wlin, blin)
    jax.block_until_ready((masks_out, class_logits))

    ref_logits = _reference_head(low_res_masks, wconv, bconv, wlin, blin)
    assert masks_out.shape == (B, 1, H, W)
    assert class_logits.shape == (B, NUM_CLASSES)
    assert jnp.allclose(class_logits, ref_logits, rtol=1e-4, atol=1e-4), (class_logits, ref_logits)
    assert jnp.array_equal(masks_out, low_res_masks)

    print("KERNEL_OK")
</pallas_src>

<mosaic_0001>
module attributes {stable_mosaic.version = 11 : i64} {
  func.func @_head_kernel(%arg0: i32, %arg1: memref<9x512xf32, #tpu.memory_space<vmem>>, %arg2: memref<32x9xf32, #tpu.memory_space<vmem>>, %arg3: memref<32x1xf32, #tpu.memory_space<vmem>>, %arg4: memref<32x128xf32, #tpu.memory_space<vmem>>, %arg5: memref<1x128xf32, #tpu.memory_space<vmem>>, %arg6: memref<2x128xf32, #tpu.memory_space<vmem>>) attributes {dimension_semantics = [#tpu.dimension_semantics<arbitrary>], iteration_bounds = array<i64: 1>, scalar_prefetch = 0 : i64, scratch_operands = 0 : i64, tpu.core_type = #tpu.core_type<tc>, window_params = [{pipeline_mode = #tpu.pipeline_mode<synchronous>, transform_indices = @transform_0, window_bounds = array<i64: 9, 512>}, {pipeline_mode = #tpu.pipeline_mode<synchronous>, transform_indices = @transform_1, window_bounds = array<i64: 32, 9>}, {pipeline_mode = #tpu.pipeline_mode<synchronous>, transform_indices = @transform_2, window_bounds = array<i64: 32, 1>}, {pipeline_mode = #tpu.pipeline_mode<synchronous>, transform_indices = @transform_3, window_bounds = array<i64: 32, 128>}, {pipeline_mode = #tpu.pipeline_mode<synchronous>, transform_indices = @transform_4, window_bounds = array<i64: 1, 128>}, {pipeline_mode = #tpu.pipeline_mode<synchronous>, transform_indices = @transform_5, window_bounds = array<i64: 2, 128>}]} {
    %c0 = arith.constant 0 : index
    %c0_0 = arith.constant 0 : index
    %0 = vector.load %arg2[%c0, %c0_0] : memref<32x9xf32, #tpu.memory_space<vmem>>, vector<32x9xf32>
    %c0_1 = arith.constant 0 : index
    %c0_2 = arith.constant 0 : index
    %1 = vector.load %arg1[%c0_1, %c0_2] : memref<9x512xf32, #tpu.memory_space<vmem>>, vector<9x512xf32>
    %cst = arith.constant dense<0.000000e+00> : vector<32x512xf32>
    %2 = tpu.matmul %0, %1, %cst {dimension_numbers = #tpu.dot_dimension_numbers<[1], [0], [0], [1], [0, 0, 1, 1], [], []>} : vector<32x9xf32>, vector<9x512xf32>, vector<32x512xf32> -> vector<32x512xf32>
    %c0_3 = arith.constant 0 : index
    %c0_4 = arith.constant 0 : index
    %3 = vector.load %arg3[%c0_3, %c0_4] : memref<32x1xf32, #tpu.memory_space<vmem>>, vector<32x1xf32>
    %4 = vector.broadcast %3 : vector<32x1xf32> to vector<32x512xf32>
    %5 = arith.addf %2, %4 : vector<32x512xf32>
    %cst_5 = arith.constant 0.000000e+00 : f32
    %6 = vector.broadcast %cst_5 : f32 to vector<32x512xf32>
    %7 = arith.maximumf %5, %6 : vector<32x512xf32>
    %8 = vector.extract_strided_slice %7 {offsets = [0, 0], sizes = [32, 256], strides = [1, 1]} : vector<32x512xf32> to vector<32x256xf32>
    %cst_6 = arith.constant dense<0.000000e+00> : vector<32xf32>
    %9 = vector.multi_reduction <add>, %8, %cst_6 [1] : vector<32x256xf32> to vector<32xf32>
    %10 = vector.shape_cast %9 : vector<32xf32> to vector<32x1xf32>
    %cst_7 = arith.constant 3.906250e-03 : f32
    %11 = vector.broadcast %cst_7 : f32 to vector<32x1xf32>
    %12 = arith.mulf %10, %11 : vector<32x1xf32>
    %c0_8 = arith.constant 0 : index
    %c0_9 = arith.constant 0 : index
    %13 = vector.load %arg4[%c0_8, %c0_9] : memref<32x128xf32, #tpu.memory_space<vmem>>, vector<32x128xf32>
    %14 = vector.broadcast %12 : vector<32x1xf32> to vector<32x128xf32>
    %15 = arith.mulf %14, %13 : vector<32x128xf32>
    %cst_10 = arith.constant dense<0.000000e+00> : vector<128xf32>
    %16 = vector.multi_reduction <add>, %15, %cst_10 [0] : vector<32x128xf32> to vector<128xf32>
    %17 = vector.shape_cast %16 : vector<128xf32> to vector<1x128xf32>
    %18 = vector.extract_strided_slice %7 {offsets = [0, 256], sizes = [32, 256], strides = [1, 1]} : vector<32x512xf32> to vector<32x256xf32>
    %cst_11 = arith.constant dense<0.000000e+00> : vector<32xf32>
    %19 = vector.multi_reduction <add>, %18, %cst_11 [1] : vector<32x256xf32> to vector<32xf32>
    %20 = vector.shape_cast %19 : vector<32xf32> to vector<32x1xf32>
    %cst_12 = arith.constant 3.906250e-03 : f32
    %21 = vector.broadcast %cst_12 : f32 to vector<32x1xf32>
    %22 = arith.mulf %20, %21 : vector<32x1xf32>
    %c0_13 = arith.constant 0 : index
    %c0_14 = arith.constant 0 : index
    %23 = vector.load %arg4[%c0_13, %c0_14] : memref<32x128xf32, #tpu.memory_space<vmem>>, vector<32x128xf32>
    %24 = vector.broadcast %22 : vector<32x1xf32> to vector<32x128xf32>
    %25 = arith.mulf %24, %23 : vector<32x128xf32>
    %cst_15 = arith.constant dense<0.000000e+00> : vector<128xf32>
    %26 = vector.multi_reduction <add>, %25, %cst_15 [0] : vector<32x128xf32> to vector<128xf32>
    %27 = vector.shape_cast %26 : vector<128xf32> to vector<1x128xf32>
    %28 = tpu.concatenate %17, %27 in 0 : vector<1x128xf32>, vector<1x128xf32> -> vector<2x128xf32>
    %c0_16 = arith.constant 0 : index
    %c0_17 = arith.constant 0 : index
    %29 = vector.load %arg5[%c0_16, %c0_17] : memref<1x128xf32, #tpu.memory_space<vmem>>, vector<1x128xf32>
    %30 = vector.broadcast %29 : vector<1x128xf32> to vector<2x128xf32>
    %31 = arith.addf %28, %30 : vector<2x128xf32>
    %c0_18 = arith.constant 0 : index
    %c0_19 = arith.constant 0 : index
    %32 = vector.load %arg6[%c0_18, %c0_19] : memref<2x128xf32, #tpu.memory_space<vmem>>, vector<2x128xf32>
    tpu.vector_store %arg6[%c0_18, %c0_19], %31 {strides = array<i32>} : memref<2x128xf32, #tpu.memory_space<vmem>>, vector<2x128xf32>,
    return
  }
  func.func @transform_0(%arg0: i32) -> (i32, i32) {
    %c0_i32 = arith.constant 0 : i32
    %c0_i32_0 = arith.constant 0 : i32
    %c0_i32_1 = arith.constant 0 : i32
    return %c0_i32, %c0_i32_0 : i32, i32
  }
  func.func @transform_1(%arg0: i32) -> (i32, i32) {
    %c0_i32 = arith.constant 0 : i32
    %c0_i32_0 = arith.constant 0 : i32
    %c0_i32_1 = arith.constant 0 : i32
    return %c0_i32, %c0_i32_0 : i32, i32
  }
  func.func @transform_2(%arg0: i32) -> (i32, i32) {
    %c0_i32 = arith.constant 0 : i32
    %c0_i32_0 = arith.constant 0 : i32
    %c0_i32_1 = arith.constant 0 : i32
    return %c0_i32, %c0_i32_0 : i32, i32
  }
  func.func @transform_3(%arg0: i32) -> (i32, i32) {
    %c0_i32 = arith.constant 0 : i32
    %c0_i32_0 = arith.constant 0 : i32
    %c0_i32_1 = arith.constant 0 : i32
    return %c0_i32, %c0_i32_0 : i32, i32
  }
  func.func @transform_4(%arg0: i32) -> (i32, i32) {
    %c0_i32 = arith.constant 0 : i32
    %c0_i32_0 = arith.constant 0 : i32
    %c0_i32_1 = arith.constant 0 : i32
    return %c0_i32, %c0_i32_0 : i32, i32
  }
  func.func @transform_5(%arg0: i32) -> (i32, i32) {
    %c0_i32 = arith.constant 0 : i32
    %c0_i32_0 = arith.constant 0 : i32
    %c0_i32_1 = arith.constant 0 : i32
    return %c0_i32, %c0_i32_0 : i32, i32
  }
}

</mosaic_0001>

<llo_original>
// kernel: tpu_custom_call.1
$region0: #{tpu_custom_call.1}
  #allocation0 [shape = 'u32[]', space=smem, size = 0x4, offset = 0x4, fixed_abs, tag = 'smem constant byte address 0x4 - core index']
  #allocation1 [shape = 'u32[144,128]{1,0:T(1,128)}', space=vmem, size = 0x12000, scoped, tag = 'internal scratch']
  %s0 = inlined_call_operand.vmem [shape: f32[9,512], index: 0, kind: input, shape index: {}]
  %s1 = inlined_call_operand.vmem [shape: f32[32,9], index: 1, kind: input, shape index: {}]
  %s2 = inlined_call_operand.vmem [shape: f32[32,1], index: 2, kind: input, shape index: {}]
  %s3 = inlined_call_operand.hbm [shape: f32[32,128], index: 3, kind: input, shape index: {}]
  %s4 = inlined_call_operand.vmem [shape: f32[1,128], index: 4, kind: input, shape index: {}]
  %s5 = inlined_call_operand.hbm [shape: f32[2,128], index: 5, kind: output, shape index: {}]
  %s6 = sld [smem:[#allocation0]]
  $region34: #{tpu_custom_call.1} parent=0
    _
  %s8 = ssub.s32 1, %s6
  %s9 = scalar_select 0, %s8, %s6
  $region1: #{tpu_custom_call.1} parent=0
    #allocation2 [shape = 'u8[16384]{0}', space=vmem, size = 0x4000, scoped, tag = 'input window, operand 3, single buffered']
    #allocation3 [shape = 's32[1]{0}', space=sflag, size = 0x4, scoped, tag = 'scoped memory for tpu_custom_call.1']
    #allocation4 [shape = 's32[1]{0}', space=sflag, size = 0x4, scoped, tag = 'scoped memory for tpu_custom_call.1']
    #allocation5 [shape = 'u8[1024]{0}', space=vmem, size = 0x400, scoped, tag = 'output window, operand 0, single buffered']
    %10 = vsyncpa [#allocation3], 0
    %11 = vsyncpa [#allocation4], 0
    // Predicated region
    $region2: #{tpu_custom_call.1} parent=1 // pred_check
      _
    $region3: #{tpu_custom_call.1} parent=1 // pred_check_branch
      %13 = sbr.rel (0) target = $region5
    $region4: #{tpu_custom_call.1} parent=1 // pred_region
      _
    $region5: #{tpu_custom_call.1} parent=1 // pred_fallthru
      _
    // Predicated region
    $region6: #{tpu_custom_call.1} parent=1 // pred_check
      _
    $region7: #{tpu_custom_call.1} parent=1 // pred_check_branch
      %15 = sbr.rel (0) target = $region9
    $region8: #{tpu_custom_call.1} parent=1 // pred_region
      _
    $region9: #{tpu_custom_call.1} parent=1 // pred_fallthru
      _
    // Predicated region
    $region10: #{tpu_custom_call.1} parent=1 // pred_check
      _
    $region11: #{tpu_custom_call.1} parent=1 // pred_check_branch
      %17 = sbr.rel (0) target = $region13
    $region12: #{tpu_custom_call.1} parent=1 // pred_region
      _
    $region13: #{tpu_custom_call.1} parent=1 // pred_fallthru
      _
    // Predicated region
    $region14: #{tpu_custom_call.1} parent=1 // pred_check
      _
    $region15: #{tpu_custom_call.1} parent=1 // pred_check_branch
      %19 = sbr.rel (0) target = $region17
    $region16: #{tpu_custom_call.1} parent=1 // pred_region
      %s21 = ssub.s32 512, 512
      %22 = vsyncadd [#allocation3], %s21
      %s23 = sshll.u32 [#allocation2], 4
      %s24 = int_to_ptr.vmem [resolvable:$true] %s23
      %29 = dma.hbm_to_vmem [thread:$0]  %s3, 512, %s24, [#allocation3], 128, 128, 8
    $region17: #{tpu_custom_call.1} parent=1 // pred_fallthru
      _
    // Predicated region
    $region18: #{tpu_custom_call.1} parent=1 // pred_check
      _
    $region19: #{tpu_custom_call.1} parent=1 // pred_check_branch
      %31 = sbr.rel (0) target = $region21
    $region20: #{tpu_custom_call.1} parent=1 // pred_region
      _
    $region21: #{tpu_custom_call.1} parent=1 // pred_fallthru
      _
    // Predicated region
    $region22: #{tpu_custom_call.1} parent=1 // pred_check
      _
    $region23: #{tpu_custom_call.1} parent=1 // pred_check_branch
      %33 = sbr.rel (0) target = $region25
    $region24: #{tpu_custom_call.1} parent=1 // pred_region
      %34 = dma.done [#allocation3], 512
    $region25: #{tpu_custom_call.1} parent=1 // pred_fallthru
      _
    %v35 = vld [vmem:[%s1] sm:$0xff]
    %v36 = vld [vmem:[%s1 + $0x8] sm:$0xff]
    %v37 = vld [vmem:[%s1 + $0x10] sm:$0xff]
    %v38 = vld [vmem:[%s1 + $0x18] sm:$0xff]
    %v39 = vld [vmem:[%s0] sm:$0xff]
    %v40 = vld [vmem:[%s0 + $0x8] sm:$0xff]
    %v41 = vld [vmem:[%s0 + $0x10] sm:$0xff]
    %v42 = vld [vmem:[%s0 + $0x18] sm:$0xff]
    %v43 = vld [vmem:[%s0 + $0x20] sm:$0x1]
    %v44 = vld [vmem:[%s0 + $0x28] sm:$0x1]
    %v45 = vld [vmem:[%s0 + $0x30] sm:$0x1]
    %v46 = vld [vmem:[%s0 + $0x38] sm:$0x1]
    %v47 = vld [vmem:[%s2] sm:$0xff]
    %v48 = vld [vmem:[%s2 + $0x8] sm:$0xff]
    %v49 = vld [vmem:[%s2 + $0x10] sm:$0xff]
    %v50 = vld [vmem:[%s2 + $0x18] sm:$0xff]
    %52 = vset.pattern.permute.xlu0 0
    %53 = vperm.xlu0 %52, %v47
    %v54 = vpop.permute.xlu0 %53
    %57 = vset.pattern.permute.xlu0 0
    %58 = vperm.xlu0 %57, %v48
    %v59 = vpop.permute.xlu0 %58
    %62 = vset.pattern.permute.xlu0 0
    %63 = vperm.xlu0 %62, %v49
    %v64 = vpop.permute.xlu0 %63
    %67 = vset.pattern.permute.xlu0 0
    %68 = vperm.xlu0 %67, %v50
    %v69 = vpop.permute.xlu0 %68
    %vm71 = vcmask 72704
    %v73 = vsel %vm71, %v35, 0
    %v76 = vsel %vm71, %v36, 0
    %v79 = vsel %vm71, %v37, 0
    %v82 = vsel %vm71, %v38, 0
    %vm84 = vcmask 1040384
    %v86 = vsel %vm84, %v43, 0
    %v89 = vsel %vm84, %v44, 0
    %v92 = vsel %vm84, %v45, 0
    %v95 = vsel %vm84, %v46, 0
    %97 = vmatprep.subr.mxu0 0.0
    %98 = vmatpush1.msra.mxu0 0.0
    %99 = vmatprep.subr.mxu0 0.0
    %100 = vmatpush1.msra.mxu0 0.0
    %101 = vmatprep.subr.mxu0 0.0
    %102 = vmatpush1.msra.mxu0 0.0
    %103 = vmatprep.subr.mxu0 0.0
    %104 = vmatpush1.msra.mxu0 0.0
    %105 = vmatprep.subr.mxu0 0.0
    %106 = vmatpush1.msra.mxu0 0.0
    %107 = vmatprep.subr.mxu0 0.0
    %108 = vmatpush1.msra.mxu0 0.0
    %109 = vmatprep.subr.mxu0 0.0
    %110 = vmatpush1.msra.mxu0 0.0
    %111 = vmatprep.subr.mxu0 0.0
    %112 = vmatpush1.msra.mxu0 0.0
    %113 = vmatprep.subr.mxu0 0.0
    %114 = vmatpush1.msra.mxu0 0.0
    %115 = vmatprep.subr.mxu0 0.0
    %116 = vmatpush1.msra.mxu0 0.0
    %117 = vmatprep.subr.mxu0 0.0
    %118 = vmatpush1.msra.mxu0 0.0
    %119 = vmatprep.subr.mxu0 0.0
    %120 = vmatpush1.msra.mxu0 0.0
    %121 = vmatprep.subr.mxu0 0.0
    %122 = vmatpush1.msra.mxu0 0.0
    %123 = vmatprep.subr.mxu0 0.0
    %124 = vmatpush1.msra.mxu0 0.0
    %125 = vmatprep.subr.mxu0 %v89
    %126 = vmatpush1.msra.mxu0 %v86
    %127 = vmatprep.subr.mxu0 %v40
    %128 = vmatpush1.msra.mxu0 %v39
    %129 = vmatprep.subr.mxu0 0.0
    %130 = vmatpush2.msra.mxu0 0.0
    %131 = vmatprep.subr.mxu0 0.0
    %132 = vmatpush2.msra.mxu0 0.0
    %133 = vmatprep.subr.mxu0 0.0
    %134 = vmatpush2.msra.mxu0 0.0
    %135 = vmatprep.subr.mxu0 0.0
    %136 = vmatpush2.msra.mxu0 0.0
    %137 = vmatprep.subr.mxu0 0.0
    %138 = vmatpush2.msra.mxu0 0.0
    %139 = vmatprep.subr.mxu0 0.0
    %140 = vmatpush2.msra.mxu0 0.0
    %141 = vmatprep.subr.mxu0 0.0
    %142 = vmatpush2.msra.mxu0 0.0
    %143 = vmatprep.subr.mxu0 0.0
    %144 = vmatpush2.msra.mxu0 0.0
    %145 = vmatprep.subr.mxu0 0.0
    %146 = vmatpush2.msra.mxu0 0.0
    %147 = vmatprep.subr.mxu0 0.0
    %148 = vmatpush2.msra.mxu0 0.0
    %149 = vmatprep.subr.mxu0 0.0
    %150 = vmatpush2.msra.mxu0 0.0
    %151 = vmatprep.subr.mxu0 0.0
    %152 = vmatpush2.msra.mxu0 0.0
    %153 = vmatprep.subr.mxu0 0.0
    %154 = vmatpush2.msra.mxu0 0.0
    %155 = vmatprep.subr.mxu0 0.0
    %156 = vmatpush2.msra.mxu0 0.0
    %157 = vmatprep.subr.mxu0 0.0
    %158 = vmatpush2.msra.mxu0 0.0
    %159 = vmatprep.subr.mxu0 0.0
    %160 = vmatpush2.msra.mxu0 0.0
    %161 = vmatprep.mubr.f32.mxu0 0.0
    %162 = vmatmul.mubr.f32.gmra.mxu0 %v73
    %v163 = vpop.f32.mrf.mxu0
    %v164 = vadd.f32 %v54, %v163
    %v165 = vpop.f32.mrf.mxu0
    %v166 = vadd.f32 %v54, %v165
    %167 = vmatprep.mubr.f32.mxu0 0.0
    %168 = vmatmul.mubr.f32.gmra.mxu0 %v76
    %v169 = vpop.f32.mrf.mxu0
    %v170 = vadd.f32 %v59, %v169
    %v171 = vpop.f32.mrf.mxu0
    %v172 = vadd.f32 %v59, %v171
    %173 = vmatprep.mubr.f32.mxu0 0.0
    %174 = vmatmul.mubr.f32.gmra.mxu0 %v79
    %v175 = vpop.f32.mrf.mxu0
    %v176 = vadd.f32 %v64, %v175
    %v177 = vpop.f32.mrf.mxu0
    %v178 = vadd.f32 %v64, %v177
    %179 = vmatprep.mubr.f32.mxu0 0.0
    %180 = vmatmul.mubr.f32.gmra.mxu0 %v82
    %v181 = vpop.f32.mrf.mxu0
    %v182 = vadd.f32 %v69, %v181
    %v183 = vpop.f32.mrf.mxu0
    %v184 = vadd.f32 %v69, %v183
    %185 = vdwg.mxu0
    %186 = vmatprep.subr.mxu0 0.0
    %187 = vmatpush1.msra.mxu0 0.0
    %188 = vmatprep.subr.mxu0 0.0
    %189 = vmatpush1.msra.mxu0 0.0
    %190 = vmatprep.subr.mxu0 0.0
    %191 = vmatpush1.msra.mxu0 0.0
    %192 = vmatprep.subr.mxu0 0.0
    %193 = vmatpush1.msra.mxu0 0.0
    %194 = vmatprep.subr.mxu0 0.0
    %195 = vmatpush1.msra.mxu0 0.0
    %196 = vmatprep.subr.mxu0 0.0
    %197 = vmatpush1.msra.mxu0 0.0
    %198 = vmatprep.subr.mxu0 0.0
    %199 = vmatpush1.msra.mxu0 0.0
    %200 = vmatprep.subr.mxu0 0.0
    %201 = vmatpush1.msra.mxu0 0.0
    %202 = vmatprep.subr.mxu0 0.0
    %203 = vmatpush1.msra.mxu0 0.0
    %204 = vmatprep.subr.mxu0 0.0
    %205 = vmatpush1.msra.mxu0 0.0
    %206 = vmatprep.subr.mxu0 0.0
    %207 = vmatpush1.msra.mxu0 0.0
    %208 = vmatprep.subr.mxu0 0.0
    %209 = vmatpush1.msra.mxu0 0.0
    %210 = vmatprep.subr.mxu0 0.0
    %211 = vmatpush1.msra.mxu0 0.0
    %212 = vmatprep.subr.mxu0 0.0
    %213 = vmatpush1.msra.mxu0 0.0
    %214 = vmatprep.subr.mxu0 %v95
    %215 = vmatpush1.msra.mxu0 %v92
    %216 = vmatprep.subr.mxu0 %v42
    %217 = vmatpush1.msra.mxu0 %v41
    %218 = vmatprep.subr.mxu0 0.0
    %219 = vmatpush2.msra.mxu0 0.0
    %220 = vmatprep.subr.mxu0 0.0
    %221 = vmatpush2.msra.mxu0 0.0
    %222 = vmatprep.subr.mxu0 0.0
    %223 = vmatpush2.msra.mxu0 0.0
    %224 = vmatprep.subr.mxu0 0.0
    %225 = vmatpush2.msra.mxu0 0.0
    %226 = vmatprep.subr.mxu0 0.0
    %227 = vmatpush2.msra.mxu0 0.0
    %228 = vmatprep.subr.mxu0 0.0
    %229 = vmatpush2.msra.mxu0 0.0
    %230 = vmatprep.subr.mxu0 0.0
    %231 = vmatpush2.msra.mxu0 0.0
    %232 = vmatprep.subr.mxu0 0.0
    %233 = vmatpush2.msra.mxu0 0.0
    %234 = vmatprep.subr.mxu0 0.0
    %235 = vmatpush2.msra.mxu0 0.0
    %236 = vmatprep.subr.mxu0 0.0
    %237 = vmatpush2.msra.mxu0 0.0
    %238 = vmatprep.subr.mxu0 0.0
    %239 = vmatpush2.msra.mxu0 0.0
    %240 = vmatprep.subr.mxu0 0.0
    %241 = vmatpush2.msra.mxu0 0.0
    %242 = vmatprep.subr.mxu0 0.0
    %243 = vmatpush2.msra.mxu0 0.0
    %244 = vmatprep.subr.mxu0 0.0
    %245 = vmatpush2.msra.mxu0 0.0
    %246 = vmatprep.subr.mxu0 0.0
    %247 = vmatpush2.msra.mxu0 0.0
    %248 = vmatprep.subr.mxu0 0.0
    %249 = vmatpush2.msra.mxu0 0.0
    %250 = vmatprep.mubr.f32.mxu0 0.0
    %251 = vmatmul.mubr.f32.gmra.mxu0 %v73
    %v252 = vpop.f32.mrf.mxu0
    %v253 = vadd.f32 %v54, %v252
    %v254 = vpop.f32.mrf.mxu0
    %v255 = vadd.f32 %v54, %v254
    %256 = vmatprep.mubr.f32.mxu0 0.0
    %257 = vmatmul.mubr.f32.gmra.mxu0 %v76
    %v258 = vpop.f32.mrf.mxu0
    %v259 = vadd.f32 %v59, %v258
    %v260 = vpop.f32.mrf.mxu0
    %v261 = vadd.f32 %v59, %v260
    %262 = vmatprep.mubr.f32.mxu0 0.0
    %263 = vmatmul.mubr.f32.gmra.mxu0 %v79
    %v264 = vpop.f32.mrf.mxu0
    %v265 = vadd.f32 %v64, %v264
    %v266 = vpop.f32.mrf.mxu0
    %v267 = vadd.f32 %v64, %v266
    %268 = vmatprep.mubr.f32.mxu0 0.0
    %269 = vmatmul.mubr.f32.gmra.mxu0 %v82
    %v270 = vpop.f32.mrf.mxu0
    %v271 = vadd.f32 %v69, %v270
    %v272 = vpop.f32.mrf.mxu0
    %v273 = vadd.f32 %v69, %v272
    %274 = vdwg.mxu0
    %v275 = vmax.f32 %v164, 0.0
    %v276 = vmax.f32 %v166, 0.0
    %v277 = vmax.f32 %v253, 0.0
    %v278 = vmax.f32 %v255, 0.0
    %v279 = vmax.f32 %v170, 0.0
    %v280 = vmax.f32 %v172, 0.0
    %v281 = vmax.f32 %v259, 0.0
    %v282 = vmax.f32 %v261, 0.0
    %v283 = vmax.f32 %v176, 0.0
    %v284 = vmax.f32 %v178, 0.0
    %v285 = vmax.f32 %v265, 0.0
    %v286 = vmax.f32 %v267, 0.0
    %v287 = vmax.f32 %v182, 0.0
    %v288 = vmax.f32 %v184, 0.0
    %v289 = vmax.f32 %v271, 0.0
    %v290 = vmax.f32 %v273, 0.0
    %v291 = vadd.f32 %v275, %v276
    %292 = vadd.xlane.f32.xlu0 %v291
    %v293 = vpop.xlane.xlu0 %292
    %v294 = vadd.f32 %v279, %v280
    %295 = vadd.xlane.f32.xlu0 %v294
    %v296 = vpop.xlane.xlu0 %295
    %v297 = vadd.f32 %v283, %v284
    %298 = vadd.xlane.f32.xlu0 %v297
    %v299 = vpop.xlane.xlu0 %298
    %v300 = vadd.f32 %v287, %v288
    %301 = vadd.xlane.f32.xlu0 %v300
    %v302 = vpop.xlane.xlu0 %301
    %v303 = vmul.f32 %v293, 0.00390625
    %v304 = vmul.f32 %v296, 0.00390625
    %v305 = vmul.f32 %v299, 0.00390625
    %v306 = vmul.f32 %v302, 0.00390625
    %v307 = vld [vmem:[#allocation2] sm:$0xff]
    %v308 = vld [vmem:[#allocation2 + $0x8] sm:$0xff]
    %v309 = vld [vmem:[#allocation2 + $0x10] sm:$0xff]
    %v310 = vld [vmem:[#allocation2 + $0x18] sm:$0xff]
    %v311 = vmul.f32 %v303, %v307
    %v312 = vmul.f32 %v304, %v308
    %v313 = vmul.f32 %v305, %v309
    %v314 = vmul.f32 %v306, %v310
    %v315 = vadd.f32 %v311, %v312
    %v316 = vadd.f32 %v315, %v313
    %v317 = vadd.f32 %v316, %v314
    %v318 = vrot.slane %v317, 4
    %v319 = vadd.f32 %v317, %v318
    %v320 = vrot.slane %v319, 2
    %v321 = vadd.f32 %v319, %v320
    %v322 = vrot.slane %v321, 1
    %v323 = vadd.f32 %v321, %v322
    %v324 = vadd.f32 %v277, %v278
    %325 = vadd.xlane.f32.xlu0 %v324
    %v326 = vpop.xlane.xlu0 %325
    %v327 = vadd.f32 %v281, %v282
    %328 = vadd.xlane.f32.xlu0 %v327
    %v329 = vpop.xlane.xlu0 %328
    %v330 = vadd.f32 %v285, %v286
    %331 = vadd.xlane.f32.xlu0 %v330
    %v332 = vpop.xlane.xlu0 %331
    %v333 = vadd.f32 %v289, %v290
    %334 = vadd.xlane.f32.xlu0 %v333
    %v335 = vpop.xlane.xlu0 %334
    %v336 = vmul.f32 %v326, 0.00390625
    %v337 = vmul.f32 %v329, 0.00390625
    %v338 = vmul.f32 %v332, 0.00390625
    %v339 = vmul.f32 %v335, 0.00390625
    %v340 = vmul.f32 %v336, %v307
    %v341 = vmul.f32 %v337, %v308
    %v342 = vmul.f32 %v338, %v309
    %v343 = vmul.f32 %v339, %v310
    %v344 = vadd.f32 %v340, %v341
    %v345 = vadd.f32 %v344, %v342
    %v346 = vadd.f32 %v345, %v343
    %v347 = vrot.slane %v346, 4
    %v348 = vadd.f32 %v346, %v347
    %v349 = vrot.slane %v348, 2
    %v350 = vadd.f32 %v348, %v349
    %v351 = vrot.slane %v350, 1
    %v352 = vadd.f32 %v350, %v351
    %v353 = vsel %vm84, %v323, %v352
    %v354 = vld [vmem:[%s4] sm:$0x1]
    %v356 = vlaneseq
    %v357 = vshrl.u32 %v356, 7
    %v358 = vsub.s32 0, %v357
    %v359 = vrot.slane %v354, %v358
    %v361 = vadd.f32 %v353, %v359
    %362 = vst [vmem:[#allocation5] sm:$0x3] %v361
    // Predicated region
    $region26: #{tpu_custom_call.1} parent=1 // pred_check
      _
    $region27: #{tpu_custom_call.1} parent=1 // pred_check_branch
      %364 = sbr.rel (0) target = $region29
    $region28: #{tpu_custom_call.1} parent=1 // pred_region
      %s366 = ssub.s32 32, 32
      %367 = vsyncadd [#allocation4], %s366
      %s369 = sshll.u32 [#allocation5], 4
      %s370 = int_to_ptr.vmem [resolvable:$true] %s369
      %372 = dma.vmem_to_hbm [thread:$0]  %s370, 32, %s5, [#allocation4]
    $region29: #{tpu_custom_call.1} parent=1 // pred_fallthru
      _
    // Predicated region
    $region30: #{tpu_custom_call.1} parent=1 // pred_check
      _
    $region31: #{tpu_custom_call.1} parent=1 // pred_check_branch
      %374 = sbr.rel (0) target = $region33
    $region32: #{tpu_custom_call.1} parent=1 // pred_region
      %375 = dma.done [#allocation4], 32
    $region33: #{tpu_custom_call.1} parent=1 // pred_fallthru
      _
    %376 = vsyncpa [#allocation3], 1
    %377 = vsyncpa [#allocation4], 1

</llo_original>
